<compile_context>
chip_gen: v7x
topology: tpu7x:2x2x1
jax: 0.10.0
libtpu: 0.0.40
codegen_flags: <defaults>
</compile_context>

<pallas_src>
import jax
import jax.numpy as jnp
from jax import lax
from jax.experimental import pallas as pl
from jax.experimental.pallas import tpu as pltpu

_LANE = 128
_BLOCK_BYTES = 2 * 1024 * 1024       # per-grid-step HBM DMA budget (native dtype)
_CHUNK_ROWS = 256                    # in-kernel sub-chunk: 256*128*4B = 128 KiB f32
_VMEM_LIMIT_BYTES = 32 * 1024 * 1024 # 2x double-buffered blocks + temps, all gens


def _round_up(a: int, b: int) -> int:
    return -(-a // b) * b


def _row_tile(dtype) -> int:
    """Minimum sublane row multiple for a dtype (8 f32 / 16 bf16 / 32 int8)."""
    return 8 * max(1, 4 // jnp.dtype(dtype).itemsize)


def _tensorcores_per_chip() -> int:
    """2 on v7x (two TensorCores share chip HBM), else 1 (v5e / v6e here)."""
    try:
        kind = jax.devices()[0].device_kind.lower()
    except Exception:
        return 1
    return 2 if "v7" in kind else 1


def _stable_softplus(v):
    """Numerically stable softplus, elementwise."""
    return jnp.maximum(v, 0.0) + jnp.log1p(jnp.exp(-jnp.abs(v)))


def _make_reduction_kernel(elem_fn, n_valid: int, tr: int, sub: int, lane: int):
    """Per-core, per-lane partial sums of elem_fn(x) over the valid elements."""
    block_elems = tr * lane
    n_chunks = tr // sub
    unroll = n_chunks if n_chunks <= 8 else 8

    def kernel(x_ref, out_ref, acc_ref):
        c = pl.program_id(0)            # TensorCore-split axis
        i = pl.program_id(1)            # streaming reduction axis
        n_inner = pl.num_programs(1)

        @pl.when(i == 0)
        def _init():
            acc_ref[...] = jnp.zeros_like(acc_ref)

        # Global element offset of this (unclamped) block in the flat input.
        start = (c * n_inner + i) * block_elems

        def chunk_body(masked):
            def body(j, acc):
                r0 = pl.multiple_of(j * sub, sub)
                vals = elem_fn(x_ref[pl.ds(r0, sub), :].astype(jnp.float32))
                if masked:
                    row = lax.broadcasted_iota(jnp.int32, (sub, lane), 0)
                    col = lax.broadcasted_iota(jnp.int32, (sub, lane), 1)
                    idx = start + (r0 + row) * lane + col
                    vals = jnp.where(idx < n_valid, vals, 0.0)
                return acc + jnp.sum(vals, axis=0, keepdims=True)
            return body

        zero = jnp.zeros((1, lane), jnp.float32)

        @pl.when(start + block_elems <= n_valid)
        def _full_block():       # fully valid: no mask work in the hot path
            acc_ref[...] += lax.fori_loop(0, n_chunks, chunk_body(False), zero,
                                          unroll=unroll)

        @pl.when(start + block_elems > n_valid)
        def _ragged_block():     # tail / overhanging blocks only
            acc_ref[...] += lax.fori_loop(0, n_chunks, chunk_body(True), zero,
                                          unroll=unroll)

        @pl.when(i == n_inner - 1)
        def _finalize():
            out_ref[...] = acc_ref[...]   # per-lane partials; collapsed outside

    return kernel


def _mean_of_elem_fn(x, elem_fn):
    """mean(elem_fn(x)) over all elements of x, via a single Pallas pass."""
    n = int(x.size)
    dtype = x.dtype
    itemsize = jnp.dtype(dtype).itemsize
    rt = _row_tile(dtype)

    # Lane-dense flat view.  Pad ONLY what the (rows, 128) reshape needs
    # (<= 127 elements, only when n % 128 != 0, or a tiny row-tile pad for
    # very small inputs) -- never to the grid extent.
    n128 = _round_up(n, _LANE)
    rows = n128 // _LANE
    if rows < rt:
        rows = rt
        n128 = rows * _LANE
    flat = jnp.ravel(x)                      # native dtype, no f32 upcast
    if n128 != n:
        flat = jnp.pad(flat, (0, n128 - n))
    x2 = flat.reshape(rows, _LANE)

    # In-kernel sub-chunk rows: multiple of the dtype row tile, <= rows.
    sub = min(_CHUNK_ROWS, (rows // rt) * rt)
    # Grid-block rows: ~_BLOCK_BYTES of native-dtype HBM per step, a multiple
    # of `sub`, never larger than the array (edge blocks only overhang).
    budget_rows = max(sub, (_BLOCK_BYTES // (_LANE * itemsize) // sub) * sub)
    n_chunks = max(1, min(budget_rows, rows) // sub)
    tr = n_chunks * sub
    n_blocks = -(-rows // tr)

    nc = _tensorcores_per_chip()
    if n_blocks < 2:
        nc = 1
    nc = min(nc, 2)

    def run(nc_):
        inner = -(-n_blocks // nc_)
        nb = n_blocks
        kernel = _make_reduction_kernel(elem_fn, n, tr, sub, _LANE)
        if nc_ > 1:
            dims = (getattr(pltpu, "CORE_PARALLEL", "parallel"),
                    getattr(pltpu, "ARBITRARY", "arbitrary"))
        else:
            dims = ("arbitrary", "arbitrary")
        partials = pl.pallas_call(
            kernel,
            out_shape=jax.ShapeDtypeStruct((nc_, 1, _LANE), jnp.float32),
            grid=(nc_, inner),
            in_specs=[pl.BlockSpec(
                (tr, _LANE),
                # Clamp to the last real block; fully-overhanging grid slots
                # re-read it and contribute zero via the in-kernel mask.
                lambda c, i: (jnp.minimum(c * inner + i, nb - 1), 0))],
            out_specs=pl.BlockSpec((None, 1, _LANE), lambda c, i: (c, 0, 0)),
            scratch_shapes=[pltpu.VMEM((1, _LANE), jnp.float32)],
            compiler_params=pltpu.CompilerParams(
                dimension_semantics=dims,
                vmem_limit_bytes=_VMEM_LIMIT_BYTES),
        )(x2)
        return jnp.sum(partials) / jnp.float32(n)

    if nc > 1:
        try:
            return run(nc)
        except Exception:   # conservative fallback if 2-core split is rejected
            pass
    return run(1)


def gan_loss_pallas(x, target_is_real, is_disc=False, gan_type="vanilla",
                    real_label_val=1.0, fake_label_val=0.0, loss_weight=1.0):
    """Forward pass of GANLoss. target_is_real / is_disc / gan_type are static."""
    target_val = float(real_label_val if target_is_real else fake_label_val)

    if gan_type == "vanilla":
        # BCEWithLogitsLoss(x, t) = max(x,0) - x*t + log1p(exp(-|x|))
        def elem_fn(v):
            return (jnp.maximum(v, 0.0) - v * target_val
                    + jnp.log1p(jnp.exp(-jnp.abs(v))))
    elif gan_type == "lsgan":
        def elem_fn(v):
            d = v - target_val
            return d * d
    elif gan_type == "wgan":
        def elem_fn(v):
            return v
    elif gan_type == "wgan_softplus":
        sign = -1.0 if target_is_real else 1.0

        def elem_fn(v):
            return _stable_softplus(sign * v)
    elif gan_type == "hinge":
        if is_disc:
            sign = -1.0 if target_is_real else 1.0

            def elem_fn(v):
                return jnp.maximum(1.0 + sign * v, 0.0)   # ReLU(1 +/- x)
        else:
            def elem_fn(v):
                return v
    else:
        raise NotImplementedError(f"GAN type {gan_type} is not implemented.")

    mean_val = _mean_of_elem_fn(x, elem_fn)

    if gan_type == "wgan":
        loss = -mean_val if target_is_real else mean_val
    elif gan_type == "hinge" and not is_disc:
        loss = -mean_val
    else:
        loss = mean_val

    return loss if is_disc else loss * loss_weight


def _gan_loss_ref(x, target_is_real, is_disc, gan_type,
                  real_label_val=1.0, fake_label_val=0.0, loss_weight=1.0):
    """Pure-JAX reference mirroring the PyTorch semantics."""
    x = x.astype(jnp.float32)
    t = real_label_val if target_is_real else fake_label_val
    if gan_type == "vanilla":
        loss = jnp.mean(jnp.maximum(x, 0) - x * t + jnp.log1p(jnp.exp(-jnp.abs(x))))
    elif gan_type == "lsgan":
        loss = jnp.mean((x - t) ** 2)
    elif gan_type == "wgan":
        loss = -jnp.mean(x) if target_is_real else jnp.mean(x)
    elif gan_type == "wgan_softplus":
        loss = (jnp.mean(jax.nn.softplus(-x)) if target_is_real
                else jnp.mean(jax.nn.softplus(x)))
    elif gan_type == "hinge":
        if is_disc:
            xi = -x if target_is_real else x
            loss = jnp.mean(jax.nn.relu(1 + xi))
        else:
            loss = -jnp.mean(x)
    return loss if is_disc else loss * loss_weight


if __name__ == "__main__":
    key = jax.random.PRNGKey(0)
    k0, k1, k2, k3, k4 = jax.random.split(key, 5)

    # Patch-GAN style discriminator prediction maps (NCHW).
    x_small = jax.random.normal(k0, (2, 4, 16, 16), dtype=jnp.float32)     # aligned, single block
    x_ragged = jax.random.normal(k1, (2, 3, 15, 17), dtype=jnp.float32)    # ragged tail, tiny pad
    x_multi = jax.random.normal(k2, (4, 9, 128, 128), dtype=jnp.float32)   # multi-block + overhanging block
    x_odd = jax.random.normal(k3, (3, 5, 99, 101), dtype=jnp.float32)      # multi-block, n % 128 != 0
    x_bf16 = jax.random.normal(k4, (2, 4, 16, 16)).astype(jnp.bfloat16)    # native bf16 path

    cases = [
        (x_small, "vanilla", True, False),
        (x_small, "vanilla", False, True),
        (x_small, "lsgan", True, False),
        (x_small, "wgan", True, True),
        (x_small, "wgan_softplus", False, True),
        (x_small, "hinge", True, True),
        (x_small, "hinge", True, False),
        (x_ragged, "vanilla", False, True),
        (x_ragged, "hinge", True, True),
        (x_multi, "lsgan", True, False),
        (x_multi, "vanilla", True, True),
        (x_odd, "vanilla", False, True),
        (x_bf16, "lsgan", False, False),
    ]

    ok = True
    for xx, gan_type, real, is_disc in cases:
        out = gan_loss_pallas(xx, target_is_real=real, is_disc=is_disc,
                              gan_type=gan_type, loss_weight=1.0)
        out = jax.block_until_ready(out)
        ref = _gan_loss_ref(xx, real, is_disc, gan_type)
        if abs(float(out) - float(ref)) > 1e-4 + 1e-4 * abs(float(ref)):
            ok = False
            print(f"MISMATCH {gan_type} shape={tuple(xx.shape)} real={real} "
                  f"disc={is_disc}: {float(out)} vs {float(ref)}")

    if ok:
        print("KERNEL_OK")
</pallas_src>

<mosaic_0001>
module attributes {stable_mosaic.version = 11 : i64} {
  func.func @kernel(%arg0: i32, %arg1: i32, %arg2: memref<16x128xf32, #tpu.memory_space<vmem>>, %arg3: memref<1x1x128xf32, #tpu.memory_space<vmem>>, %arg4: memref<1x128xf32, #tpu.memory_space<vmem>>) attributes {dimension_semantics = [#tpu.dimension_semantics<arbitrary>, #tpu.dimension_semantics<arbitrary>], iteration_bounds = array<i64: 1, 1>, scalar_prefetch = 0 : i64, scratch_operands = 1 : i64, tpu.core_type = #tpu.core_type<tc>, window_params = [{transform_indices = @transform_0, window_bounds = array<i64: 16, 128>}, {transform_indices = @transform_1, window_bounds = array<i64: 1, 1, 128>}]} {
    %c0_i32 = arith.constant 0 : i32
    %0 = arith.cmpi eq, %arg1, %c0_i32 : i32
    %1 = arith.extui %0 : i1 to i32
    %c0_i32_0 = arith.constant 0 : i32
    %2 = arith.cmpi ne, %1, %c0_i32_0 : i32
    scf.if %2 {
      %cst_9 = arith.constant 0.000000e+00 : f32
      %18 = vector.broadcast %cst_9 : f32 to vector<1x128xf32>
      %c0 = arith.constant 0 : index
      %c0_10 = arith.constant 0 : index
      %19 = vector.load %arg4[%c0, %c0_10] : memref<1x128xf32, #tpu.memory_space<vmem>>, vector<1x128xf32>
      tpu.vector_store %arg4[%c0, %c0_10], %18 {strides = array<i32>} : memref<1x128xf32, #tpu.memory_space<vmem>>, vector<1x128xf32>,
    } else {
    }
    %c1_i32 = arith.constant 1 : i32
    %3 = arith.muli %arg0, %c1_i32 : i32
    %4 = arith.addi %3, %arg1 : i32
    %c2048_i32 = arith.constant 2048 : i32
    %5 = arith.muli %4, %c2048_i32 : i32
    %cst = arith.constant 0.000000e+00 : f32
    %6 = vector.broadcast %cst : f32 to vector<1x128xf32>
    %c2048_i32_1 = arith.constant 2048 : i32
    %7 = arith.addi %5, %c2048_i32_1 : i32
    %c2048_i32_2 = arith.constant 2048 : i32
    %8 = arith.cmpi sle, %7, %c2048_i32_2 : i32
    %9 = arith.extui %8 : i1 to i32
    %c0_i32_3 = arith.constant 0 : i32
    %10 = arith.cmpi ne, %9, %c0_i32_3 : i32
    scf.if %10 {
      %c0 = arith.constant 0 : index
      %c0_9 = arith.constant 0 : index
      %18 = vector.load %arg4[%c0, %c0_9] : memref<1x128xf32, #tpu.memory_space<vmem>>, vector<1x128xf32>
      %c0_i32_10 = arith.constant 0 : i32
      %c16_i32 = arith.constant 16 : i32
      %19 = arith.muli %c0_i32_10, %c16_i32 : i32
      %20 = tpu.assume_multiple %19, 16 : i32
      %21 = arith.index_cast %20 : i32 to index
      %c0_11 = arith.constant 0 : index
      %22 = vector.load %arg2[%21, %c0_11] : memref<16x128xf32, #tpu.memory_space<vmem>>, vector<16x128xf32>
      %cst_12 = arith.constant 0.000000e+00 : f32
      %23 = vector.broadcast %cst_12 : f32 to vector<16x128xf32>
      %24 = arith.maximumf %22, %23 : vector<16x128xf32>
      %cst_13 = arith.constant 1.000000e+00 : f32
      %25 = vector.broadcast %cst_13 : f32 to vector<16x128xf32>
      %26 = arith.mulf %22, %25 : vector<16x128xf32>
      %27 = arith.subf %24, %26 : vector<16x128xf32>
      %28 = math.absf %22 : vector<16x128xf32>
      %cst_14 = arith.constant 0.000000e+00 : f32
      %29 = vector.broadcast %cst_14 : f32 to vector<16x128xf32>
      %30 = arith.subf %29, %28 : vector<16x128xf32>
      %31 = math.exp %30 : vector<16x128xf32>
      %32 = math.log1p %31 : vector<16x128xf32>
      %33 = arith.addf %27, %32 : vector<16x128xf32>
      %cst_15 = arith.constant dense<0.000000e+00> : vector<128xf32>
      %34 = vector.multi_reduction <add>, %33, %cst_15 [0] : vector<16x128xf32> to vector<128xf32>
      %35 = vector.shape_cast %34 : vector<128xf32> to vector<1x128xf32>
      %36 = arith.addf %6, %35 : vector<1x128xf32>
      %c1_i32_16 = arith.constant 1 : i32
      %37 = arith.addf %18, %36 : vector<1x128xf32>
      %c0_17 = arith.constant 0 : index
      %c0_18 = arith.constant 0 : index
      %38 = vector.load %arg4[%c0_17, %c0_18] : memref<1x128xf32, #tpu.memory_space<vmem>>, vector<1x128xf32>
      tpu.vector_store %arg4[%c0_17, %c0_18], %37 {strides = array<i32>} : memref<1x128xf32, #tpu.memory_space<vmem>>, vector<1x128xf32>,
    } else {
    }
    %c2048_i32_4 = arith.constant 2048 : i32
    %11 = arith.addi %5, %c2048_i32_4 : i32
    %c2048_i32_5 = arith.constant 2048 : i32
    %12 = arith.cmpi sgt, %11, %c2048_i32_5 : i32
    %13 = arith.extui %12 : i1 to i32
    %c0_i32_6 = arith.constant 0 : i32
    %14 = arith.cmpi ne, %13, %c0_i32_6 : i32
    scf.if %14 {
      %c0 = arith.constant 0 : index
      %c0_9 = arith.constant 0 : index
      %18 = vector.load %arg4[%c0, %c0_9] : memref<1x128xf32, #tpu.memory_space<vmem>>, vector<1x128xf32>
      %c0_i32_10 = arith.constant 0 : i32
      %c16_i32 = arith.constant 16 : i32
      %19 = arith.muli %c0_i32_10, %c16_i32 : i32
      %20 = tpu.assume_multiple %19, 16 : i32
      %21 = arith.index_cast %20 : i32 to index
      %c0_11 = arith.constant 0 : index
      %22 = vector.load %arg2[%21, %c0_11] : memref<16x128xf32, #tpu.memory_space<vmem>>, vector<16x128xf32>
      %cst_12 = arith.constant 0.000000e+00 : f32
      %23 = vector.broadcast %cst_12 : f32 to vector<16x128xf32>
      %24 = arith.maximumf %22, %23 : vector<16x128xf32>
      %cst_13 = arith.constant 1.000000e+00 : f32
      %25 = vector.broadcast %cst_13 : f32 to vector<16x128xf32>
      %26 = arith.mulf %22, %25 : vector<16x128xf32>
      %27 = arith.subf %24, %26 : vector<16x128xf32>
      %28 = math.absf %22 : vector<16x128xf32>
      %cst_14 = arith.constant 0.000000e+00 : f32
      %29 = vector.broadcast %cst_14 : f32 to vector<16x128xf32>
      %30 = arith.subf %29, %28 : vector<16x128xf32>
      %31 = math.exp %30 : vector<16x128xf32>
      %32 = math.log1p %31 : vector<16x128xf32>
      %33 = arith.addf %27, %32 : vector<16x128xf32>
      %34 = tpu.iota {dimensions = array<i32: 0>} : vector<16x128xi32>
      %35 = tpu.iota {dimensions = array<i32: 1>} : vector<16x128xi32>
      %36 = vector.broadcast %20 : i32 to vector<16x128xi32>
      %37 = arith.addi %36, %34 : vector<16x128xi32>
      %c128_i32 = arith.constant 128 : i32
      %38 = vector.broadcast %c128_i32 : i32 to vector<16x128xi32>
      %39 = arith.muli %37, %38 : vector<16x128xi32>
      %40 = vector.broadcast %5 : i32 to vector<16x128xi32>
      %41 = arith.addi %40, %39 : vector<16x128xi32>
      %42 = arith.addi %41, %35 : vector<16x128xi32>
      %c2048_i32_15 = arith.constant 2048 : i32
      %43 = vector.broadcast %c2048_i32_15 : i32 to vector<16x128xi32>
      %44 = arith.cmpi slt, %42, %43 : vector<16x128xi32>
      %cst_16 = arith.constant 0.000000e+00 : f32
      %45 = vector.broadcast %cst_16 : f32 to vector<16x128xf32>
      %46 = arith.select %44, %33, %45 : vector<16x128xi1>, vector<16x128xf32>
      %cst_17 = arith.constant dense<0.000000e+00> : vector<128xf32>
      %47 = vector.multi_reduction <add>, %46, %cst_17 [0] : vector<16x128xf32> to vector<128xf32>
      %48 = vector.shape_cast %47 : vector<128xf32> to vector<1x128xf32>
      %49 = arith.addf %6, %48 : vector<1x128xf32>
      %c1_i32_18 = arith.constant 1 : i32
      %50 = arith.addf %18, %49 : vector<1x128xf32>
      %c0_19 = arith.constant 0 : index
      %c0_20 = arith.constant 0 : index
      %51 = vector.load %arg4[%c0_19, %c0_20] : memref<1x128xf32, #tpu.memory_space<vmem>>, vector<1x128xf32>
      tpu.vector_store %arg4[%c0_19, %c0_20], %50 {strides = array<i32>} : memref<1x128xf32, #tpu.memory_space<vmem>>, vector<1x128xf32>,
    } else {
    }
    %c0_i32_7 = arith.constant 0 : i32
    %15 = arith.cmpi eq, %arg1, %c0_i32_7 : i32
    %16 = arith.extui %15 : i1 to i32
    %c0_i32_8 = arith.constant 0 : i32
    %17 = arith.cmpi ne, %16, %c0_i32_8 : i32
    scf.if %17 {
      %c0 = arith.constant 0 : index
      %c0_9 = arith.constant 0 : index
      %18 = vector.load %arg4[%c0, %c0_9] : memref<1x128xf32, #tpu.memory_space<vmem>>, vector<1x128xf32>
      %c0_10 = arith.constant 0 : index
      %c0_11 = arith.constant 0 : index
      %c0_12 = arith.constant 0 : index
      %19 = vector.load %arg3[%c0_10, %c0_11, %c0_12] : memref<1x1x128xf32, #tpu.memory_space<vmem>>, vector<1x1x128xf32>
      %20 = vector.shape_cast %19 : vector<1x1x128xf32> to vector<1x128xf32>
      %21 = vector.shape_cast %18 : vector<1x128xf32> to vector<1x1x128xf32>
      tpu.vector_store %arg3[%c0_10, %c0_11, %c0_12], %21 {strides = array<i32>} : memref<1x1x128xf32, #tpu.memory_space<vmem>>, vector<1x1x128xf32>,
    } else {
    }
    return
  }
  func.func @transform_0(%arg0: i32, %arg1: i32) -> (i32, i32) {
    %c1_i32 = arith.constant 1 : i32
    %0 = arith.muli %arg0, %c1_i32 : i32
    %1 = arith.addi %0, %arg1 : i32
    %c0_i32 = arith.constant 0 : i32
    %2 = arith.minsi %1, %c0_i32 : i32
    %c0_i32_0 = arith.constant 0 : i32
    %c0_i32_1 = arith.constant 0 : i32
    return %2, %c0_i32_0 : i32, i32
  }
  func.func @transform_1(%arg0: i32, %arg1: i32) -> (i32, i32, i32) {
    %c0_i32 = arith.constant 0 : i32
    %c0_i32_0 = arith.constant 0 : i32
    %c0_i32_1 = arith.constant 0 : i32
    return %arg0, %c0_i32, %c0_i32_0 : i32, i32, i32
  }
}

</mosaic_0001>

<llo_original>
// kernel: tpu_custom_call.1
$region0: #{tpu_custom_call.1}
  #allocation0 [shape = 'u32[]', space=smem, size = 0x4, offset = 0x4, fixed_abs, tag = 'smem constant byte address 0x4 - core index']
  #allocation1 [shape = 'u32[144,128]{1,0:T(1,128)}', space=vmem, size = 0x12000, scoped, tag = 'internal scratch']
  #allocation2 [shape = 'f32[1,128]{1,0:T(1,128)}', space=vmem, size = 0x200, scoped, tag = 'scratch operand']
  %s0 = inlined_call_operand.hbm [shape: f32[16,128], index: 0, kind: input, shape index: {}]
  %s1 = inlined_call_operand.hbm [shape: f32[1,1,128], index: 1, kind: output, shape index: {}]
  %s2 = sld [smem:[#allocation0]]
  $region34: #{tpu_custom_call.1} parent=0
    _
  %s4 = ssub.s32 1, %s2
  %s5 = scalar_select 0, %s4, %s2
  $region1: #{tpu_custom_call.1} parent=0
    #allocation3 [shape = 'u8[8192]{0}', space=vmem, size = 0x2000, scoped, tag = 'input window, operand 0, single buffered']
    #allocation4 [shape = 's32[1]{0}', space=sflag, size = 0x4, scoped, tag = 'scoped memory for tpu_custom_call.1']
    #allocation5 [shape = 's32[1]{0}', space=sflag, size = 0x4, scoped, tag = 'scoped memory for tpu_custom_call.1']
    #allocation6 [shape = 'u8[512]{0}', space=vmem, size = 0x400, scoped, tag = 'output window, operand 0, single buffered']
    %6 = vsyncpa [#allocation4], 0
    %7 = vsyncpa [#allocation5], 0
    // Predicated region
    $region2: #{tpu_custom_call.1} parent=1 // pred_check
      _
    $region3: #{tpu_custom_call.1} parent=1 // pred_check_branch
      %9 = sbr.rel (0) target = $region5
    $region4: #{tpu_custom_call.1} parent=1 // pred_region
      %s10 = sadd.s32 0, 0
      %p11 = scmp.lt.s32.totalorder %s10, 0
      %s12 = scalar_select %p11, %s10, 0
      %s13 = smul.u32 2, %s12
      %s15 = ssub.s32 256, 256
      %16 = vsyncadd [#allocation4], %s15
      %s17 = smul.addr %s13, 128
      %s18 = scalar_lea.hbm %s0, %s17
      %s19 = sshll.u32 [#allocation3], 4
      %s20 = int_to_ptr.vmem [resolvable:$true] %s19
      %25 = dma.hbm_to_vmem [thread:$0]  %s18, 256, %s20, [#allocation4], 128, 128, 8
    $region5: #{tpu_custom_call.1} parent=1 // pred_fallthru
      _
    // Predicated region
    $region6: #{tpu_custom_call.1} parent=1 // pred_check
      _
    $region7: #{tpu_custom_call.1} parent=1 // pred_check_branch
      %27 = sbr.rel (0) target = $region9
    $region8: #{tpu_custom_call.1} parent=1 // pred_region
      %28 = dma.done [#allocation4], 256
    $region9: #{tpu_custom_call.1} parent=1 // pred_fallthru
      _
    %s29 = sadd.s32 0, 0
    %p30 = scmp.lt.s32.totalorder %s29, 0
    %s31 = scalar_select %p30, %s29, 0
    %s32 = smul.u32 2, %s31
    %p33 = scmp.eq.s32.totalorder 0, 0
    // Predicated region
    $region10: #{tpu_custom_call.1} parent=1 // pred_check
      %p34 = pneg %p33
    $region11: #{tpu_custom_call.1} parent=1 // pred_check_branch
      %36 = sbr.rel (%p34) target = $region13
    $region12: #{tpu_custom_call.1} parent=1 // pred_region
      %37 = vst [vmem:[#allocation2] sm:$0x1] 0.0
    $region13: #{tpu_custom_call.1} parent=1 // pred_fallthru
      _
    %s38 = sadd.s32 0, 0
    %s39 = smul.u32 %s38, 2048
    %s40 = sadd.s32 %s39, 2048
    %p41 = scmp.le.s32.totalorder %s40, 2048
    // Predicated region
    $region14: #{tpu_custom_call.1} parent=1 // pred_check
      %p42 = pneg %p41
    $region15: #{tpu_custom_call.1} parent=1 // pred_check_branch
      %44 = sbr.rel (%p42) target = $region17
    $region16: #{tpu_custom_call.1} parent=1 // pred_region
      %v45 = vld [vmem:[#allocation2] sm:$0x1]
      %v46 = vld [vmem:[#allocation3] sm:$0xff]
      %v47 = vld [vmem:[#allocation3 + $0x8] sm:$0xff]
      %v48 = vmax.f32 %v46, 0.0
      %v49 = vmax.f32 %v47, 0.0
      %v50 = vsub.f32 %v48, %v46
      %v51 = vsub.f32 %v49, %v47
      %v52 = vand.u32 2147483647, %v46
      %v53 = vand.u32 2147483647, %v47
      %v54 = vsub.f32 0.0, %v52
      %v55 = vsub.f32 0.0, %v53
      %v56 = vmul.f32 %v54, 1.442695
      %v57 = vpow.pop %v56
      %v58 = vmul.f32 %v55, 1.442695
      %v59 = vpow.pop %v58
      %v60 = vadd.f32 %v57, 1.0
      %v61 = vlog2.pop %v60
      %v62 = vmul.f32 %v61, 0.6931472
      %v63 = vmul.f32 -0.5, %v57
      %v64 = vadd.f32 %v63, 1.0
      %v65 = vmul.f32 %v64, %v57
      %v66 = vand.u32 2147483647, %v57
      %vm67 = vcmp.lt.f32.partialorder %v66, 0.0004427343
      %v68 = vsel %vm67, %v65, %v62
      %v69 = vadd.f32 %v59, 1.0
      %v70 = vlog2.pop %v69
      %v71 = vmul.f32 %v70, 0.6931472
      %v72 = vmul.f32 -0.5, %v59
      %v73 = vadd.f32 %v72, 1.0
      %v74 = vmul.f32 %v73, %v59
      %v75 = vand.u32 2147483647, %v59
      %vm76 = vcmp.lt.f32.partialorder %v75, 0.0004427343
      %v77 = vsel %vm76, %v74, %v71
      %v78 = vadd.f32 %v50, %v68
      %v79 = vadd.f32 %v51, %v77
      %v80 = vadd.f32 %v78, %v79
      %v81 = vrot.slane %v80, 4
      %v82 = vadd.f32 %v80, %v81
      %v83 = vrot.slane %v82, 2
      %v84 = vadd.f32 %v82, %v83
      %v85 = vrot.slane %v84, 1
      %v86 = vadd.f32 %v84, %v85
      %v87 = vadd.f32 %v86, 0.0
      %v88 = vadd.f32 %v45, %v87
      %89 = vst [vmem:[#allocation2] sm:$0x1] %v88
    $region17: #{tpu_custom_call.1} parent=1 // pred_fallthru
      _
    %p90 = scmp.gt.s32.totalorder %s40, 2048
    // Predicated region
    $region18: #{tpu_custom_call.1} parent=1 // pred_check
      %p91 = pneg %p90
    $region19: #{tpu_custom_call.1} parent=1 // pred_check_branch
      %93 = sbr.rel (%p91) target = $region21
    $region20: #{tpu_custom_call.1} parent=1 // pred_region
      %v94 = vld [vmem:[#allocation2] sm:$0x1]
      %v95 = vld [vmem:[#allocation3] sm:$0xff]
      %v96 = vld [vmem:[#allocation3 + $0x8] sm:$0xff]
      %v97 = vmax.f32 %v95, 0.0
      %v98 = vmax.f32 %v96, 0.0
      %v99 = vsub.f32 %v97, %v95
      %v100 = vsub.f32 %v98, %v96
      %v101 = vand.u32 2147483647, %v95
      %v102 = vand.u32 2147483647, %v96
      %v103 = vsub.f32 0.0, %v101
      %v104 = vsub.f32 0.0, %v102
      %v105 = vmul.f32 %v103, 1.442695
      %v106 = vpow.pop %v105
      %v107 = vmul.f32 %v104, 1.442695
      %v108 = vpow.pop %v107
      %v109 = vadd.f32 %v106, 1.0
      %v110 = vlog2.pop %v109
      %v111 = vmul.f32 %v110, 0.6931472
      %v112 = vmul.f32 -0.5, %v106
      %v113 = vadd.f32 %v112, 1.0
      %v114 = vmul.f32 %v113, %v106
      %v115 = vand.u32 2147483647, %v106
      %vm116 = vcmp.lt.f32.partialorder %v115, 0.0004427343
      %v117 = vsel %vm116, %v114, %v111
      %v118 = vadd.f32 %v108, 1.0
      %v119 = vlog2.pop %v118
      %v120 = vmul.f32 %v119, 0.6931472
      %v121 = vmul.f32 -0.5, %v108
      %v122 = vadd.f32 %v121, 1.0
      %v123 = vmul.f32 %v122, %v108
      %v124 = vand.u32 2147483647, %v108
      %vm125 = vcmp.lt.f32.partialorder %v124, 0.0004427343
      %v126 = vsel %vm125, %v123, %v120
      %v127 = vadd.f32 %v99, %v117
      %v128 = vadd.f32 %v100, %v126
      %v129 = vlaneseq
      %v130 = vshrl.u32 %v129, 7
      %v131 = vadd.s32 %v130, 8
      %v132 = vlaneseq
      %v133 = vand.u32 %v132, 127
      %v134 = vstv 0
      %v135 = vadd.s32 %v134, %v130
      %v136 = vadd.s32 %v134, %v131
      %v137 = vmul.u32 %v135, 128
      %v138 = vmul.u32 %v136, 128
      %v139 = vstv %s39
      %v140 = vadd.s32 %v139, %v137
      %v141 = vadd.s32 %v139, %v138
      %v142 = vadd.s32 %v140, %v133
      %v143 = vadd.s32 %v141, %v133
      %vm144 = vcmp.lt.s32.totalorder %v142, 2048
      %vm145 = vcmp.lt.s32.totalorder %v143, 2048
      %v146 = vsel %vm144, %v127, 0.0
      %v147 = vsel %vm145, %v128, 0.0
      %v148 = vadd.f32 %v146, %v147
      %v149 = vrot.slane %v148, 4
      %v150 = vadd.f32 %v148, %v149
      %v151 = vrot.slane %v150, 2
      %v152 = vadd.f32 %v150, %v151
      %v153 = vrot.slane %v152, 1
      %v154 = vadd.f32 %v152, %v153
      %v155 = vadd.f32 %v154, 0.0
      %v156 = vadd.f32 %v94, %v155
      %157 = vst [vmem:[#allocation2] sm:$0x1] %v156
    $region21: #{tpu_custom_call.1} parent=1 // pred_fallthru
      _
    // Predicated region
    $region22: #{tpu_custom_call.1} parent=1 // pred_check
      %p158 = pneg %p33
    $region23: #{tpu_custom_call.1} parent=1 // pred_check_branch
      %160 = sbr.rel (%p158) target = $region25
    $region24: #{tpu_custom_call.1} parent=1 // pred_region
      %v161 = vld [vmem:[#allocation2] sm:$0x1]
      %162 = vst [vmem:[#allocation6] sm:$0x1] %v161
    $region25: #{tpu_custom_call.1} parent=1 // pred_fallthru
      _
    // Predicated region
    $region26: #{tpu_custom_call.1} parent=1 // pred_check
      _
    $region27: #{tpu_custom_call.1} parent=1 // pred_check_branch
      %164 = sbr.rel (0) target = $region29
    $region28: #{tpu_custom_call.1} parent=1 // pred_region
      %s166 = ssub.s32 16, 16
      %167 = vsyncadd [#allocation5], %s166
      %s169 = sshll.u32 [#allocation6], 4
      %s170 = int_to_ptr.vmem [resolvable:$true] %s169
      %172 = dma.vmem_to_hbm [thread:$0]  %s170, 16, %s1, [#allocation5]
    $region29: #{tpu_custom_call.1} parent=1 // pred_fallthru
      _
    // Predicated region
    $region30: #{tpu_custom_call.1} parent=1 // pred_check
      _
    $region31: #{tpu_custom_call.1} parent=1 // pred_check_branch
      %174 = sbr.rel (0) target = $region33
    $region32: #{tpu_custom_call.1} parent=1 // pred_region
      %175 = dma.done [#allocation5], 16
    $region33: #{tpu_custom_call.1} parent=1 // pred_fallthru
      _
    %176 = vsyncpa [#allocation4], 1
    %177 = vsyncpa [#allocation5], 1

</llo_original>
